<compile_context>
chip_gen: v7x
topology: tpu7x:2x2x1
jax: 0.10.0
libtpu: 0.0.40
codegen_flags: <defaults>
</compile_context>

<pallas_src>
import jax
import jax.numpy as jnp
import numpy as np
from jax.experimental import pallas as pl
from jax.experimental.pallas import tpu as pltpu

LEAKY_SLOPE = 0.2
MAX_TILE_T = 4096          # lane tile over the (T - L) axis; multiple of 128
MAX_BLOCK_B = 8            # batches handled per grid step


def _leaky(h):
    return jnp.where(h > 0, h, LEAKY_SLOPE * h)


# ---------------- Pallas kernel ----------------

def _make_kernel(L, tile_out, block_b, has_halo):
    def kernel(*refs):
        if has_halo:
            emb_ref, w_ref, x_ref, halo_ref, out_ref = refs
        else:
            emb_ref, w_ref, x_ref, out_ref = refs

        for bi in range(block_b):                              # static unroll
            win = x_ref[bi]                                    # (D, tile_in)
            if has_halo:
                # first L columns of the next tile (same array, narrow block)
                win = jnp.concatenate([win, halo_ref[bi, :, :L]], axis=1)
            acc = emb_ref[bi]                                  # (D, 1) -> lane broadcast
            for l in range(L + 1):                             # L+1 shifted (D,D)x(D,tile) dots
                acc = acc + jnp.dot(w_ref[l], win[:, l:l + tile_out],
                                    preferred_element_type=jnp.float32)
            out_ref[bi] = acc.astype(out_ref.dtype)
    return kernel


# ---------------- wrapper ----------------

def np_change_instantaneous_transition_prior(x, embeddings, alphas, params, L,
                                             *, max_tile_t=MAX_TILE_T,
                                             max_block_b=MAX_BLOCK_B):
    """Pallas-backed forward. Returns (residuals (B, T-L, D), sum_log_abs_det_jacobian (B,))."""
    del alphas  # already folded into params["Wxx"]
    B, T, D = x.shape
    Tm = T - L

    # --- hoisted per-batch work (tiny XLA): embedding MLP -> Wemb fold + bias ---
    h = _leaky(embeddings @ params["W1"] + params["b1"])
    h = _leaky(h @ params["W2"] + params["b2"])
    h = h @ params["W3"] + params["b3"]
    emb_c = (h @ params["Wemb"] + params["gb"]).reshape(B, D, 1).astype(jnp.float32)

    # --- per-lag weights, transposed so residual[:, t] += Wl^T @ x[:, t + l] ---
    w_lag = jnp.concatenate([params["Wyy"], params["Wxx"]], axis=0)          # (K, D), lag-major
    w_lag = w_lag.reshape(L + 1, D, D).transpose(0, 2, 1).astype(jnp.float32)

    # --- lane-dense layout: time on the lane axis (see TODO at top) ---
    xt = jnp.swapaxes(x, 1, 2).astype(jnp.float32)                           # (B, D, T)

    block_b = min(B, max_block_b)
    n_b = pl.cdiv(B, block_b)

    if Tm <= max_tile_t:
        # single time tile per batch block: full-T input block, full-Tm output block
        tile_t, has_halo = Tm, False
        x_specs = [pl.BlockSpec((block_b, D, T), lambda b, t: (b, 0, 0))]
        x_args = (xt,)
    else:
        assert max_tile_t % 128 == 0
        tile_t, has_halo = max_tile_t, True
        blk128 = tile_t // 128
        n128 = pl.cdiv(T, 128)
        x_specs = [
            pl.BlockSpec((block_b, D, tile_t), lambda b, t: (b, 0, t)),
            # 128-lane halo from the start of the next tile of the SAME array;
            # block index clamped at the array end (clamped data is never used).
            pl.BlockSpec((block_b, D, 128),
                         lambda b, t: (b, 0, jnp.minimum((t + 1) * blk128, n128 - 1))),
        ]
        x_args = (xt, xt)
    n_t = pl.cdiv(Tm, tile_t)

    kernel = _make_kernel(L, tile_t, block_b, has_halo)
    out = pl.pallas_call(
        kernel,
        out_shape=jax.ShapeDtypeStruct((B, D, Tm), jnp.float32),
        grid=(n_b, n_t),
        in_specs=[
            pl.BlockSpec((block_b, D, 1), lambda b, t: (b, 0, 0)),           # emb_c
            pl.BlockSpec((L + 1, D, D), lambda b, t: (0, 0, 0)),             # per-lag weights
            *x_specs,                                                        # x (+ halo)
        ],
        out_specs=pl.BlockSpec((block_b, D, tile_t), lambda b, t: (b, 0, t)),
        compiler_params=pltpu.CompilerParams(
            dimension_semantics=("parallel", "parallel"),
            vmem_limit_bytes=32 * 1024 * 1024),
    )(emb_c, w_lag, *x_args)

    # Module contract returns (B, T-L, D).  This swap is the only output relayout
    # pass; drop it if the downstream consumer accepts the (B, D, T-L) layout.
    residuals = jnp.swapaxes(out, 1, 2)

    # log|d gs_i/d xx_i| of the affine gs[i] is log|w_i[-1]| (parameter-only),
    # exactly what vmap(jacfwd(gs_i))[:, 0, -1] yields.
    logdet = jnp.sum(jnp.log(jnp.abs(params["wlast"])))
    sum_log_abs_det_jacobian = jnp.full((B,), Tm * logdet, jnp.float32)
    return residuals, sum_log_abs_det_jacobian


# ---------------- pure-JAX reference (mirrors the PyTorch forward) ----------------

def reference_forward(x, embeddings, alphas, raw, L):
    B, T, D = x.shape
    H = raw["W3"].shape[1]
    Tm = T - L

    h = embeddings @ raw["W1"] + raw["b1"]
    h = _leaky(h)
    h = h @ raw["W2"] + raw["b2"]
    h = _leaky(h)
    h = h @ raw["W3"] + raw["b3"]
    emb_rep = jnp.repeat(h[:, None, :], Tm, axis=1).reshape(-1, H)

    # x.unfold(1, L+1, 1).swapaxes(2, 3) built from L+1 shifted slices
    win = jnp.stack([x[:, l:l + Tm] for l in range(L + 1)], axis=2)          # (B, Tm, L+1, D)
    xw = win.reshape(-1, L + 1, D)
    xx = xw[:, -1, :]
    yy = xw[:, :-1, :].reshape(-1, L * D)

    residuals = []
    logdet = jnp.zeros((xx.shape[0],), jnp.float32)
    for i in range(D):
        w = raw["gw"][i]                       # (i + H + L*D + 1,)
        b = raw["gb_raw"][i]
        parts = [xx[:, j:j + 1] * alphas[i, j] for j in range(i)]
        parts += [emb_rep, yy, xx[:, i:i + 1]]
        inp = jnp.concatenate(parts, axis=-1)
        residuals.append(inp @ w[:, None] + b)
        # vmap(jacfwd(gs[i]))(inputs)[:, 0, -1] == w[-1]  (gs[i] is affine)
        logdet = logdet + jnp.log(jnp.abs(w[-1]))
    residuals = jnp.concatenate(residuals, axis=-1).reshape(B, Tm, D)
    sum_ld = jnp.sum(logdet.reshape(B, Tm), axis=1)
    return residuals, sum_ld


# ---------------- parameter construction / packing ----------------

def make_raw_params(key, D, E, H, L):
    pk = jax.random.split(key, 6 + 2 * D)
    W1 = 0.1 * jax.random.normal(pk[0], (E, H), jnp.float32)
    b1 = 0.1 * jax.random.normal(pk[1], (1, H), jnp.float32)
    W2 = 0.1 * jax.random.normal(pk[2], (H, H), jnp.float32)
    b2 = 0.1 * jax.random.normal(pk[3], (1, H), jnp.float32)
    W3 = 0.1 * jax.random.normal(pk[4], (H, H), jnp.float32)
    b3 = 0.1 * jax.random.normal(pk[5], (1, H), jnp.float32)
    # gs[i]: num_layers=0 -> single affine map of size (i + H + L*D + 1) -> 1
    gw = [0.1 * jax.random.normal(pk[6 + i], (i + H + L * D + 1,), jnp.float32)
          for i in range(D)]
    gb_raw = [0.1 * jax.random.normal(pk[6 + D + i], (), jnp.float32) for i in range(D)]
    # self.u (latent_size x latent_size, zeros) is unused in forward -> not materialized.
    return dict(W1=W1, b1=b1, W2=W2, b2=b2, W3=W3, b3=b3, gw=gw, gb_raw=gb_raw)


def pack_params(raw, alphas, D, H, L):
    """Re-pack the ragged gs weights into dense matmul operands (one-time)."""
    gw, gb_raw = raw["gw"], raw["gb_raw"]
    Wemb = jnp.stack([gw[i][i:i + H] for i in range(D)], axis=1)              # (H, D)
    Wyy = jnp.stack([gw[i][i + H:i + H + L * D] for i in range(D)], axis=1)   # (L*D, D)
    wlast = jnp.stack([gw[i][-1] for i in range(D)]).reshape(1, D)            # (1, D)
    Wxx = jnp.zeros((D, D), jnp.float32)
    for i in range(D):
        for j in range(i):
            Wxx = Wxx.at[j, i].set(gw[i][j] * alphas[i, j])                   # alphas folded in
        Wxx = Wxx.at[i, i].set(gw[i][-1])
    gb = jnp.stack(gb_raw).reshape(1, D)
    return dict(W1=raw["W1"], b1=raw["b1"], W2=raw["W2"], b2=raw["b2"],
                W3=raw["W3"], b3=raw["b3"],
                Wemb=Wemb, Wyy=Wyy, Wxx=Wxx, gb=gb, wlast=wlast)


# ---------------- test harness ----------------

def _run_case(B, T, D, L, E, H, **kw):
    key = jax.random.PRNGKey(0)
    kx, ke, ka, kp = jax.random.split(key, 4)
    x = jax.random.normal(kx, (B, T, D), jnp.float32)
    embeddings = jax.random.normal(ke, (B, E), jnp.float32)
    alphas = jax.random.normal(ka, (D, D), jnp.float32)

    raw = make_raw_params(kp, D, E, H, L)
    params = pack_params(raw, alphas, D, H, L)

    residuals, sum_ld = np_change_instantaneous_transition_prior(
        x, embeddings, alphas, params, L, **kw)
    jax.block_until_ready((residuals, sum_ld))

    ref_res, ref_ld = reference_forward(x, embeddings, alphas, raw, L)
    np.testing.assert_allclose(np.asarray(residuals), np.asarray(ref_res),
                               rtol=1e-3, atol=1e-3)
    np.testing.assert_allclose(np.asarray(sum_ld), np.asarray(ref_ld),
                               rtol=1e-3, atol=1e-3)
    assert residuals.shape == (B, T - L, D)
    assert sum_ld.shape == (B,)


if __name__ == "__main__":
    # single-tile path (batch=2, length=8, latent=4, lags=2, emb=8, hidden=32)
    _run_case(B=2, T=8, D=4, L=2, E=8, H=32)
    # multi-tile + halo + partial-last-tile path (small sizes, tile forced to 128)
    _run_case(B=2, T=302, D=4, L=2, E=8, H=32, max_tile_t=128)
    print("KERNEL_OK")
</pallas_src>

<mosaic_0001>
module attributes {stable_mosaic.version = 11 : i64} {
  func.func @kernel(%arg0: i32, %arg1: i32, %arg2: memref<2x4x1xf32, #tpu.memory_space<vmem>>, %arg3: memref<3x4x4xf32, #tpu.memory_space<vmem>>, %arg4: memref<2x4x8xf32, #tpu.memory_space<vmem>>, %arg5: memref<2x4x6xf32, #tpu.memory_space<vmem>>) attributes {dimension_semantics = [#tpu.dimension_semantics<parallel>, #tpu.dimension_semantics<parallel>], iteration_bounds = array<i64: 1, 1>, scalar_prefetch = 0 : i64, scratch_operands = 0 : i64, tpu.core_type = #tpu.core_type<tc>, window_params = [{transform_indices = @transform_0, window_bounds = array<i64: 2, 4, 1>}, {pipeline_mode = #tpu.pipeline_mode<synchronous>, transform_indices = @transform_1, window_bounds = array<i64: 3, 4, 4>}, {transform_indices = @transform_2, window_bounds = array<i64: 2, 4, 8>}, {transform_indices = @transform_3, window_bounds = array<i64: 2, 4, 6>}]} {
    %c0 = arith.constant 0 : index
    %c0_0 = arith.constant 0 : index
    %c0_1 = arith.constant 0 : index
    %0 = vector.load %arg4[%c0, %c0_0, %c0_1] : memref<2x4x8xf32, #tpu.memory_space<vmem>>, vector<1x4x8xf32>
    %1 = vector.shape_cast %0 : vector<1x4x8xf32> to vector<4x8xf32>
    %c0_2 = arith.constant 0 : index
    %c0_3 = arith.constant 0 : index
    %c0_4 = arith.constant 0 : index
    %2 = vector.load %arg2[%c0_2, %c0_3, %c0_4] : memref<2x4x1xf32, #tpu.memory_space<vmem>>, vector<1x4x1xf32>
    %3 = vector.shape_cast %2 : vector<1x4x1xf32> to vector<4x1xf32>
    %c0_5 = arith.constant 0 : index
    %c0_6 = arith.constant 0 : index
    %c0_7 = arith.constant 0 : index
    %4 = vector.load %arg3[%c0_5, %c0_6, %c0_7] : memref<3x4x4xf32, #tpu.memory_space<vmem>>, vector<1x4x4xf32>
    %5 = vector.shape_cast %4 : vector<1x4x4xf32> to vector<4x4xf32>
    %6 = vector.extract_strided_slice %1 {offsets = [0, 0], sizes = [4, 6], strides = [1, 1]} : vector<4x8xf32> to vector<4x6xf32>
    %cst = arith.constant dense<0.000000e+00> : vector<4x6xf32>
    %7 = tpu.matmul %5, %6, %cst {dimension_numbers = #tpu.dot_dimension_numbers<[1], [0], [0], [1], [0, 0, 1, 1], [], []>} : vector<4x4xf32>, vector<4x6xf32>, vector<4x6xf32> -> vector<4x6xf32>
    %8 = vector.broadcast %3 : vector<4x1xf32> to vector<4x6xf32>
    %9 = arith.addf %8, %7 : vector<4x6xf32>
    %c1 = arith.constant 1 : index
    %c0_8 = arith.constant 0 : index
    %c0_9 = arith.constant 0 : index
    %10 = vector.load %arg3[%c1, %c0_8, %c0_9] : memref<3x4x4xf32, #tpu.memory_space<vmem>>, vector<1x4x4xf32>
    %11 = vector.shape_cast %10 : vector<1x4x4xf32> to vector<4x4xf32>
    %12 = vector.extract_strided_slice %1 {offsets = [0, 1], sizes = [4, 6], strides = [1, 1]} : vector<4x8xf32> to vector<4x6xf32>
    %cst_10 = arith.constant dense<0.000000e+00> : vector<4x6xf32>
    %13 = tpu.matmul %11, %12, %cst_10 {dimension_numbers = #tpu.dot_dimension_numbers<[1], [0], [0], [1], [0, 0, 1, 1], [], []>} : vector<4x4xf32>, vector<4x6xf32>, vector<4x6xf32> -> vector<4x6xf32>
    %14 = arith.addf %9, %13 : vector<4x6xf32>
    %c2 = arith.constant 2 : index
    %c0_11 = arith.constant 0 : index
    %c0_12 = arith.constant 0 : index
    %15 = vector.load %arg3[%c2, %c0_11, %c0_12] : memref<3x4x4xf32, #tpu.memory_space<vmem>>, vector<1x4x4xf32>
    %16 = vector.shape_cast %15 : vector<1x4x4xf32> to vector<4x4xf32>
    %17 = vector.extract_strided_slice %1 {offsets = [0, 2], sizes = [4, 6], strides = [1, 1]} : vector<4x8xf32> to vector<4x6xf32>
    %cst_13 = arith.constant dense<0.000000e+00> : vector<4x6xf32>
    %18 = tpu.matmul %16, %17, %cst_13 {dimension_numbers = #tpu.dot_dimension_numbers<[1], [0], [0], [1], [0, 0, 1, 1], [], []>} : vector<4x4xf32>, vector<4x6xf32>, vector<4x6xf32> -> vector<4x6xf32>
    %19 = arith.addf %14, %18 : vector<4x6xf32>
    %c0_14 = arith.constant 0 : index
    %c0_15 = arith.constant 0 : index
    %c0_16 = arith.constant 0 : index
    %20 = vector.load %arg5[%c0_14, %c0_15, %c0_16] : memref<2x4x6xf32, #tpu.memory_space<vmem>>, vector<1x4x6xf32>
    %21 = vector.shape_cast %20 : vector<1x4x6xf32> to vector<4x6xf32>
    %22 = vector.shape_cast %19 : vector<4x6xf32> to vector<1x4x6xf32>
    tpu.vector_store %arg5[%c0_14, %c0_15, %c0_16], %22 {strides = array<i32>} : memref<2x4x6xf32, #tpu.memory_space<vmem>>, vector<1x4x6xf32>,
    %c1_17 = arith.constant 1 : index
    %c0_18 = arith.constant 0 : index
    %c0_19 = arith.constant 0 : index
    %23 = vector.load %arg4[%c1_17, %c0_18, %c0_19] : memref<2x4x8xf32, #tpu.memory_space<vmem>>, vector<1x4x8xf32>
    %24 = vector.shape_cast %23 : vector<1x4x8xf32> to vector<4x8xf32>
    %c1_20 = arith.constant 1 : index
    %c0_21 = arith.constant 0 : index
    %c0_22 = arith.constant 0 : index
    %25 = vector.load %arg2[%c1_20, %c0_21, %c0_22] : memref<2x4x1xf32, #tpu.memory_space<vmem>>, vector<1x4x1xf32>
    %26 = vector.shape_cast %25 : vector<1x4x1xf32> to vector<4x1xf32>
    %c0_23 = arith.constant 0 : index
    %c0_24 = arith.constant 0 : index
    %c0_25 = arith.constant 0 : index
    %27 = vector.load %arg3[%c0_23, %c0_24, %c0_25] : memref<3x4x4xf32, #tpu.memory_space<vmem>>, vector<1x4x4xf32>
    %28 = vector.shape_cast %27 : vector<1x4x4xf32> to vector<4x4xf32>
    %29 = vector.extract_strided_slice %24 {offsets = [0, 0], sizes = [4, 6], strides = [1, 1]} : vector<4x8xf32> to vector<4x6xf32>
    %cst_26 = arith.constant dense<0.000000e+00> : vector<4x6xf32>
    %30 = tpu.matmul %28, %29, %cst_26 {dimension_numbers = #tpu.dot_dimension_numbers<[1], [0], [0], [1], [0, 0, 1, 1], [], []>} : vector<4x4xf32>, vector<4x6xf32>, vector<4x6xf32> -> vector<4x6xf32>
    %31 = vector.broadcast %26 : vector<4x1xf32> to vector<4x6xf32>
    %32 = arith.addf %31, %30 : vector<4x6xf32>
    %c1_27 = arith.constant 1 : index
    %c0_28 = arith.constant 0 : index
    %c0_29 = arith.constant 0 : index
    %33 = vector.load %arg3[%c1_27, %c0_28, %c0_29] : memref<3x4x4xf32, #tpu.memory_space<vmem>>, vector<1x4x4xf32>
    %34 = vector.shape_cast %33 : vector<1x4x4xf32> to vector<4x4xf32>
    %35 = vector.extract_strided_slice %24 {offsets = [0, 1], sizes = [4, 6], strides = [1, 1]} : vector<4x8xf32> to vector<4x6xf32>
    %cst_30 = arith.constant dense<0.000000e+00> : vector<4x6xf32>
    %36 = tpu.matmul %34, %35, %cst_30 {dimension_numbers = #tpu.dot_dimension_numbers<[1], [0], [0], [1], [0, 0, 1, 1], [], []>} : vector<4x4xf32>, vector<4x6xf32>, vector<4x6xf32> -> vector<4x6xf32>
    %37 = arith.addf %32, %36 : vector<4x6xf32>
    %c2_31 = arith.constant 2 : index
    %c0_32 = arith.constant 0 : index
    %c0_33 = arith.constant 0 : index
    %38 = vector.load %arg3[%c2_31, %c0_32, %c0_33] : memref<3x4x4xf32, #tpu.memory_space<vmem>>, vector<1x4x4xf32>
    %39 = vector.shape_cast %38 : vector<1x4x4xf32> to vector<4x4xf32>
    %40 = vector.extract_strided_slice %24 {offsets = [0, 2], sizes = [4, 6], strides = [1, 1]} : vector<4x8xf32> to vector<4x6xf32>
    %cst_34 = arith.constant dense<0.000000e+00> : vector<4x6xf32>
    %41 = tpu.matmul %39, %40, %cst_34 {dimension_numbers = #tpu.dot_dimension_numbers<[1], [0], [0], [1], [0, 0, 1, 1], [], []>} : vector<4x4xf32>, vector<4x6xf32>, vector<4x6xf32> -> vector<4x6xf32>
    %42 = arith.addf %37, %41 : vector<4x6xf32>
    %c1_35 = arith.constant 1 : index
    %c0_36 = arith.constant 0 : index
    %c0_37 = arith.constant 0 : index
    %43 = vector.load %arg5[%c1_35, %c0_36, %c0_37] : memref<2x4x6xf32, #tpu.memory_space<vmem>>, vector<1x4x6xf32>
    %44 = vector.shape_cast %43 : vector<1x4x6xf32> to vector<4x6xf32>
    %45 = vector.shape_cast %42 : vector<4x6xf32> to vector<1x4x6xf32>
    tpu.vector_store %arg5[%c1_35, %c0_36, %c0_37], %45 {strides = array<i32>} : memref<2x4x6xf32, #tpu.memory_space<vmem>>, vector<1x4x6xf32>,
    return
  }
  func.func @transform_0(%arg0: i32, %arg1: i32) -> (i32, i32, i32) {
    %c0_i32 = arith.constant 0 : i32
    %c0_i32_0 = arith.constant 0 : i32
    %c0_i32_1 = arith.constant 0 : i32
    return %arg0, %c0_i32, %c0_i32_0 : i32, i32, i32
  }
  func.func @transform_1(%arg0: i32, %arg1: i32) -> (i32, i32, i32) {
    %c0_i32 = arith.constant 0 : i32
    %c0_i32_0 = arith.constant 0 : i32
    %c0_i32_1 = arith.constant 0 : i32
    %c0_i32_2 = arith.constant 0 : i32
    return %c0_i32, %c0_i32_0, %c0_i32_1 : i32, i32, i32
  }
  func.func @transform_2(%arg0: i32, %arg1: i32) -> (i32, i32, i32) {
    %c0_i32 = arith.constant 0 : i32
    %c0_i32_0 = arith.constant 0 : i32
    %c0_i32_1 = arith.constant 0 : i32
    return %arg0, %c0_i32, %c0_i32_0 : i32, i32, i32
  }
  func.func @transform_3(%arg0: i32, %arg1: i32) -> (i32, i32, i32) {
    %c0_i32 = arith.constant 0 : i32
    %c0_i32_0 = arith.constant 0 : i32
    return %arg0, %c0_i32, %arg1 : i32, i32, i32
  }
}

</mosaic_0001>

<llo_original>
// kernel: tpu_custom_call.1
$region0: #{tpu_custom_call.1}
  #allocation0 [shape = 'u32[]', space=smem, size = 0x4, offset = 0x4, fixed_abs, tag = 'smem constant byte address 0x4 - core index']
  #allocation1 [shape = 'u32[144,128]{1,0:T(1,128)}', space=vmem, size = 0x12000, scoped, tag = 'internal scratch']
  %s0 = inlined_call_operand.vmem [shape: f32[2,4,1], index: 0, kind: input, shape index: {}]
  %s1 = inlined_call_operand.vmem [shape: f32[3,4,4], index: 1, kind: input, shape index: {}]
  %s2 = inlined_call_operand.hbm [shape: f32[2,4,8], index: 2, kind: input, shape index: {}]
  %s3 = inlined_call_operand.hbm [shape: f32[2,4,6], index: 3, kind: output, shape index: {}]
  %s4 = sld [smem:[#allocation0]]
  $region26: #{tpu_custom_call.1} parent=0
    _
  %s6 = ssub.s32 1, %s4
  %s7 = scalar_select 0, %s6, %s4
  $region1: #{tpu_custom_call.1} parent=0
    #allocation2 [shape = 'u8[4096]{0}', space=vmem, size = 0x1000, scoped, tag = 'input window, operand 2, single buffered']
    #allocation3 [shape = 's32[1]{0}', space=sflag, size = 0x4, scoped, tag = 'scoped memory for tpu_custom_call.1']
    #allocation4 [shape = 's32[1]{0}', space=sflag, size = 0x4, scoped, tag = 'scoped memory for tpu_custom_call.1']
    #allocation5 [shape = 'u8[4096]{0}', space=vmem, size = 0x1000, scoped, tag = 'output window, operand 0, single buffered']
    %8 = vsyncpa [#allocation3], 0
    %9 = vsyncpa [#allocation4], 0
    // Predicated region
    $region2: #{tpu_custom_call.1} parent=1 // pred_check
      _
    $region3: #{tpu_custom_call.1} parent=1 // pred_check_branch
      %11 = sbr.rel (0) target = $region5
    $region4: #{tpu_custom_call.1} parent=1 // pred_region
      _
    $region5: #{tpu_custom_call.1} parent=1 // pred_fallthru
      _
    // Predicated region
    $region6: #{tpu_custom_call.1} parent=1 // pred_check
      _
    $region7: #{tpu_custom_call.1} parent=1 // pred_check_branch
      %13 = sbr.rel (0) target = $region9
    $region8: #{tpu_custom_call.1} parent=1 // pred_region
      _
    $region9: #{tpu_custom_call.1} parent=1 // pred_fallthru
      _
    // Predicated region
    $region10: #{tpu_custom_call.1} parent=1 // pred_check
      _
    $region11: #{tpu_custom_call.1} parent=1 // pred_check_branch
      %15 = sbr.rel (0) target = $region13
    $region12: #{tpu_custom_call.1} parent=1 // pred_region
      %s17 = ssub.s32 128, 128
      %18 = vsyncadd [#allocation3], %s17
      %s19 = sshll.u32 [#allocation2], 4
      %s20 = int_to_ptr.vmem [resolvable:$true] %s19
      %25 = dma.hbm_to_vmem [thread:$0]  %s2, 128, %s20, [#allocation3], 64, 64, 4
    $region13: #{tpu_custom_call.1} parent=1 // pred_fallthru
      _
    // Predicated region
    $region14: #{tpu_custom_call.1} parent=1 // pred_check
      _
    $region15: #{tpu_custom_call.1} parent=1 // pred_check_branch
      %27 = sbr.rel (0) target = $region17
    $region16: #{tpu_custom_call.1} parent=1 // pred_region
      %28 = dma.done [#allocation3], 128
    $region17: #{tpu_custom_call.1} parent=1 // pred_fallthru
      _
    %v29 = vld [vmem:[#allocation2] sm:$0xf]
    %v30 = vld [vmem:[%s0] sm:$0xf]
    %v31 = vld [vmem:[%s1] sm:$0xf]
    %vm32 = vcmask 31744
    %v34 = vsel %vm32, %v31, 0
    %vm36 = vcmask 1043456
    %v38 = vsel %vm36, %v29, 0
    %40 = vmatprep.subr.mxu0 0.0
    %41 = vmatpush1.msra.mxu0 %v38
    %42 = vmatprep.subr.mxu0 0.0
    %43 = vmatpush1.msra.mxu0 0.0
    %44 = vmatprep.subr.mxu0 0.0
    %45 = vmatpush1.msra.mxu0 0.0
    %46 = vmatprep.subr.mxu0 0.0
    %47 = vmatpush1.msra.mxu0 0.0
    %48 = vmatprep.subr.mxu0 0.0
    %49 = vmatpush1.msra.mxu0 0.0
    %50 = vmatprep.subr.mxu0 0.0
    %51 = vmatpush1.msra.mxu0 0.0
    %52 = vmatprep.subr.mxu0 0.0
    %53 = vmatpush1.msra.mxu0 0.0
    %54 = vmatprep.subr.mxu0 0.0
    %55 = vmatpush1.msra.mxu0 0.0
    %56 = vmatprep.subr.mxu0 0.0
    %57 = vmatpush1.msra.mxu0 0.0
    %58 = vmatprep.subr.mxu0 0.0
    %59 = vmatpush1.msra.mxu0 0.0
    %60 = vmatprep.subr.mxu0 0.0
    %61 = vmatpush1.msra.mxu0 0.0
    %62 = vmatprep.subr.mxu0 0.0
    %63 = vmatpush1.msra.mxu0 0.0
    %64 = vmatprep.subr.mxu0 0.0
    %65 = vmatpush1.msra.mxu0 0.0
    %66 = vmatprep.subr.mxu0 0.0
    %67 = vmatpush1.msra.mxu0 0.0
    %68 = vmatprep.subr.mxu0 0.0
    %69 = vmatpush1.msra.mxu0 0.0
    %70 = vmatprep.subr.mxu0 0.0
    %71 = vmatpush1.msra.mxu0 0.0
    %72 = vmatprep.subr.mxu0 0.0
    %73 = vmatpush1.msra.mxu0 0.0
    %74 = vmatprep.subr.mxu0 0.0
    %75 = vmatpush1.msra.mxu0 0.0
    %76 = vmatprep.subr.mxu0 0.0
    %77 = vmatpush1.msra.mxu0 0.0
    %78 = vmatprep.subr.mxu0 0.0
    %79 = vmatpush1.msra.mxu0 0.0
    %80 = vmatprep.subr.mxu0 0.0
    %81 = vmatpush1.msra.mxu0 0.0
    %82 = vmatprep.subr.mxu0 0.0
    %83 = vmatpush1.msra.mxu0 0.0
    %84 = vmatprep.subr.mxu0 0.0
    %85 = vmatpush1.msra.mxu0 0.0
    %86 = vmatprep.subr.mxu0 0.0
    %87 = vmatpush1.msra.mxu0 0.0
    %88 = vmatprep.subr.mxu0 0.0
    %89 = vmatpush1.msra.mxu0 0.0
    %90 = vmatprep.subr.mxu0 0.0
    %91 = vmatpush1.msra.mxu0 0.0
    %92 = vmatprep.subr.mxu0 0.0
    %93 = vmatpush1.msra.mxu0 0.0
    %94 = vmatprep.subr.mxu0 0.0
    %95 = vmatpush1.msra.mxu0 0.0
    %96 = vmatprep.subr.mxu0 0.0
    %97 = vmatpush1.msra.mxu0 0.0
    %98 = vmatprep.subr.mxu0 0.0
    %99 = vmatpush1.msra.mxu0 0.0
    %100 = vmatprep.subr.mxu0 0.0
    %101 = vmatpush1.msra.mxu0 0.0
    %102 = vmatprep.subr.mxu0 0.0
    %103 = vmatpush1.msra.mxu0 0.0
    %104 = vmatprep.mubr.f32.mxu0 0.0
    %105 = vmatmul.mubr.f32.gmra.mrb[0].mxu0 %v34
    %v106 = vpop.f32.mrb[0].mxu0
    %v107 = vadd.f32 0.0, %v106
    %v108 = vpop.f32.mrb[0].mxu0
    %109 = vdwg.mxu0
    %111 = vset.pattern.permute.xlu0 0
    %112 = vperm.xlu0 %111, %v30
    %v113 = vpop.permute.xlu0 %112
    %v115 = vadd.f32 %v113, %v107
    %s116 = scalar_lea.vmem %s1, 4
    %v117 = vld [vmem:[%s116] sm:$0xf]
    %118 = vrot.lane.b32.xlu0 %v29, 127
    %v119 = vpop.permute.xlu0 %118
    %v121 = vsel %vm32, %v117, 0
    %v123 = vsel %vm36, %v119, 0
    %125 = vmatprep.subr.mxu0 0.0
    %126 = vmatpush1.msra.mxu0 %v123
    %127 = vmatprep.subr.mxu0 0.0
    %128 = vmatpush1.msra.mxu0 0.0
    %129 = vmatprep.subr.mxu0 0.0
    %130 = vmatpush1.msra.mxu0 0.0
    %131 = vmatprep.subr.mxu0 0.0
    %132 = vmatpush1.msra.mxu0 0.0
    %133 = vmatprep.subr.mxu0 0.0
    %134 = vmatpush1.msra.mxu0 0.0
    %135 = vmatprep.subr.mxu0 0.0
    %136 = vmatpush1.msra.mxu0 0.0
    %137 = vmatprep.subr.mxu0 0.0
    %138 = vmatpush1.msra.mxu0 0.0
    %139 = vmatprep.subr.mxu0 0.0
    %140 = vmatpush1.msra.mxu0 0.0
    %141 = vmatprep.subr.mxu0 0.0
    %142 = vmatpush1.msra.mxu0 0.0
    %143 = vmatprep.subr.mxu0 0.0
    %144 = vmatpush1.msra.mxu0 0.0
    %145 = vmatprep.subr.mxu0 0.0
    %146 = vmatpush1.msra.mxu0 0.0
    %147 = vmatprep.subr.mxu0 0.0
    %148 = vmatpush1.msra.mxu0 0.0
    %149 = vmatprep.subr.mxu0 0.0
    %150 = vmatpush1.msra.mxu0 0.0
    %151 = vmatprep.subr.mxu0 0.0
    %152 = vmatpush1.msra.mxu0 0.0
    %153 = vmatprep.subr.mxu0 0.0
    %154 = vmatpush1.msra.mxu0 0.0
    %155 = vmatprep.subr.mxu0 0.0
    %156 = vmatpush1.msra.mxu0 0.0
    %157 = vmatprep.subr.mxu0 0.0
    %158 = vmatpush1.msra.mxu0 0.0
    %159 = vmatprep.subr.mxu0 0.0
    %160 = vmatpush1.msra.mxu0 0.0
    %161 = vmatprep.subr.mxu0 0.0
    %162 = vmatpush1.msra.mxu0 0.0
    %163 = vmatprep.subr.mxu0 0.0
    %164 = vmatpush1.msra.mxu0 0.0
    %165 = vmatprep.subr.mxu0 0.0
    %166 = vmatpush1.msra.mxu0 0.0
    %167 = vmatprep.subr.mxu0 0.0
    %168 = vmatpush1.msra.mxu0 0.0
    %169 = vmatprep.subr.mxu0 0.0
    %170 = vmatpush1.msra.mxu0 0.0
    %171 = vmatprep.subr.mxu0 0.0
    %172 = vmatpush1.msra.mxu0 0.0
    %173 = vmatprep.subr.mxu0 0.0
    %174 = vmatpush1.msra.mxu0 0.0
    %175 = vmatprep.subr.mxu0 0.0
    %176 = vmatpush1.msra.mxu0 0.0
    %177 = vmatprep.subr.mxu0 0.0
    %178 = vmatpush1.msra.mxu0 0.0
    %179 = vmatprep.subr.mxu0 0.0
    %180 = vmatpush1.msra.mxu0 0.0
    %181 = vmatprep.subr.mxu0 0.0
    %182 = vmatpush1.msra.mxu0 0.0
    %183 = vmatprep.subr.mxu0 0.0
    %184 = vmatpush1.msra.mxu0 0.0
    %185 = vmatprep.subr.mxu0 0.0
    %186 = vmatpush1.msra.mxu0 0.0
    %187 = vmatprep.subr.mxu0 0.0
    %188 = vmatpush1.msra.mxu0 0.0
    %189 = vmatprep.mubr.f32.mxu0 0.0
    %190 = vmatmul.mubr.f32.gmra.mrb[0].mxu0 %v121
    %v191 = vpop.f32.mrb[0].mxu0
    %v192 = vadd.f32 0.0, %v191
    %v193 = vpop.f32.mrb[0].mxu0
    %194 = vdwg.mxu0
    %v195 = vadd.f32 %v115, %v192
    %s196 = scalar_lea.vmem %s1, 8
    %v197 = vld [vmem:[%s196] sm:$0xf]
    %198 = vrot.lane.b32.xlu0 %v29, 126
    %v199 = vpop.permute.xlu0 %198
    %v201 = vsel %vm32, %v197, 0
    %v203 = vsel %vm36, %v199, 0
    %205 = vmatprep.subr.mxu0 0.0
    %206 = vmatpush1.msra.mxu0 %v203
    %207 = vmatprep.subr.mxu0 0.0
    %208 = vmatpush1.msra.mxu0 0.0
    %209 = vmatprep.subr.mxu0 0.0
    %210 = vmatpush1.msra.mxu0 0.0
    %211 = vmatprep.subr.mxu0 0.0
    %212 = vmatpush1.msra.mxu0 0.0
    %213 = vmatprep.subr.mxu0 0.0
    %214 = vmatpush1.msra.mxu0 0.0
    %215 = vmatprep.subr.mxu0 0.0
    %216 = vmatpush1.msra.mxu0 0.0
    %217 = vmatprep.subr.mxu0 0.0
    %218 = vmatpush1.msra.mxu0 0.0
    %219 = vmatprep.subr.mxu0 0.0
    %220 = vmatpush1.msra.mxu0 0.0
    %221 = vmatprep.subr.mxu0 0.0
    %222 = vmatpush1.msra.mxu0 0.0
    %223 = vmatprep.subr.mxu0 0.0
    %224 = vmatpush1.msra.mxu0 0.0
    %225 = vmatprep.subr.mxu0 0.0
    %226 = vmatpush1.msra.mxu0 0.0
    %227 = vmatprep.subr.mxu0 0.0
    %228 = vmatpush1.msra.mxu0 0.0
    %229 = vmatprep.subr.mxu0 0.0
    %230 = vmatpush1.msra.mxu0 0.0
    %231 = vmatprep.subr.mxu0 0.0
    %232 = vmatpush1.msra.mxu0 0.0
    %233 = vmatprep.subr.mxu0 0.0
    %234 = vmatpush1.msra.mxu0 0.0
    %235 = vmatprep.subr.mxu0 0.0
    %236 = vmatpush1.msra.mxu0 0.0
    %237 = vmatprep.subr.mxu0 0.0
    %238 = vmatpush1.msra.mxu0 0.0
    %239 = vmatprep.subr.mxu0 0.0
    %240 = vmatpush1.msra.mxu0 0.0
    %241 = vmatprep.subr.mxu0 0.0
    %242 = vmatpush1.msra.mxu0 0.0
    %243 = vmatprep.subr.mxu0 0.0
    %244 = vmatpush1.msra.mxu0 0.0
    %245 = vmatprep.subr.mxu0 0.0
    %246 = vmatpush1.msra.mxu0 0.0
    %247 = vmatprep.subr.mxu0 0.0
    %248 = vmatpush1.msra.mxu0 0.0
    %249 = vmatprep.subr.mxu0 0.0
    %250 = vmatpush1.msra.mxu0 0.0
    %251 = vmatprep.subr.mxu0 0.0
    %252 = vmatpush1.msra.mxu0 0.0
    %253 = vmatprep.subr.mxu0 0.0
    %254 = vmatpush1.msra.mxu0 0.0
    %255 = vmatprep.subr.mxu0 0.0
    %256 = vmatpush1.msra.mxu0 0.0
    %257 = vmatprep.subr.mxu0 0.0
    %258 = vmatpush1.msra.mxu0 0.0
    %259 = vmatprep.subr.mxu0 0.0
    %260 = vmatpush1.msra.mxu0 0.0
    %261 = vmatprep.subr.mxu0 0.0
    %262 = vmatpush1.msra.mxu0 0.0
    %263 = vmatprep.subr.mxu0 0.0
    %264 = vmatpush1.msra.mxu0 0.0
    %265 = vmatprep.subr.mxu0 0.0
    %266 = vmatpush1.msra.mxu0 0.0
    %267 = vmatprep.subr.mxu0 0.0
    %268 = vmatpush1.msra.mxu0 0.0
    %269 = vmatprep.mubr.f32.mxu0 0.0
    %270 = vmatmul.mubr.f32.gmra.mrb[0].mxu0 %v201
    %v271 = vpop.f32.mrb[0].mxu0
    %v272 = vadd.f32 0.0, %v271
    %v273 = vpop.f32.mrb[0].mxu0
    %274 = vdwg.mxu0
    %v275 = vadd.f32 %v195, %v272
    %vm276 = vcmask 44032
    %277 = vst.msk [vmem:[#allocation5] sm:$0xf] %vm276, %v275
    %s278 = scalar_lea.vmem [#allocation2], 4
    %v279 = vld [vmem:[%s278] sm:$0xf]
    %s280 = scalar_lea.vmem %s0, 4
    %v281 = vld [vmem:[%s280] sm:$0xf]
    %v282 = vld [vmem:[%s1] sm:$0xf]
    %v284 = vsel %vm32, %v282, 0
    %v287 = vsel %vm36, %v279, 0
    %289 = vmatprep.subr.mxu0 0.0
    %290 = vmatpush1.msra.mxu0 %v287
    %291 = vmatprep.subr.mxu0 0.0
    %292 = vmatpush1.msra.mxu0 0.0
    %293 = vmatprep.subr.mxu0 0.0
    %294 = vmatpush1.msra.mxu0 0.0
    %295 = vmatprep.subr.mxu0 0.0
    %296 = vmatpush1.msra.mxu0 0.0
    %297 = vmatprep.subr.mxu0 0.0
    %298 = vmatpush1.msra.mxu0 0.0
    %299 = vmatprep.subr.mxu0 0.0
    %300 = vmatpush1.msra.mxu0 0.0
    %301 = vmatprep.subr.mxu0 0.0
    %302 = vmatpush1.msra.mxu0 0.0
    %303 = vmatprep.subr.mxu0 0.0
    %304 = vmatpush1.msra.mxu0 0.0
    %305 = vmatprep.subr.mxu0 0.0
    %306 = vmatpush1.msra.mxu0 0.0
    %307 = vmatprep.subr.mxu0 0.0
    %308 = vmatpush1.msra.mxu0 0.0
    %309 = vmatprep.subr.mxu0 0.0
    %310 = vmatpush1.msra.mxu0 0.0
    %311 = vmatprep.subr.mxu0 0.0
    %312 = vmatpush1.msra.mxu0 0.0
    %313 = vmatprep.subr.mxu0 0.0
    %314 = vmatpush1.msra.mxu0 0.0
    %315 = vmatprep.subr.mxu0 0.0
    %316 = vmatpush1.msra.mxu0 0.0
    %317 = vmatprep.subr.mxu0 0.0
    %318 = vmatpush1.msra.mxu0 0.0
    %319 = vmatprep.subr.mxu0 0.0
    %320 = vmatpush1.msra.mxu0 0.0
    %321 = vmatprep.subr.mxu0 0.0
    %322 = vmatpush1.msra.mxu0 0.0
    %323 = vmatprep.subr.mxu0 0.0
    %324 = vmatpush1.msra.mxu0 0.0
    %325 = vmatprep.subr.mxu0 0.0
    %326 = vmatpush1.msra.mxu0 0.0
    %327 = vmatprep.subr.mxu0 0.0
    %328 = vmatpush1.msra.mxu0 0.0
    %329 = vmatprep.subr.mxu0 0.0
    %330 = vmatpush1.msra.mxu0 0.0
    %331 = vmatprep.subr.mxu0 0.0
    %332 = vmatpush1.msra.mxu0 0.0
    %333 = vmatprep.subr.mxu0 0.0
    %334 = vmatpush1.msra.mxu0 0.0
    %335 = vmatprep.subr.mxu0 0.0
    %336 = vmatpush1.msra.mxu0 0.0
    %337 = vmatprep.subr.mxu0 0.0
    %338 = vmatpush1.msra.mxu0 0.0
    %339 = vmatprep.subr.mxu0 0.0
    %340 = vmatpush1.msra.mxu0 0.0
    %341 = vmatprep.subr.mxu0 0.0
    %342 = vmatpush1.msra.mxu0 0.0
    %343 = vmatprep.subr.mxu0 0.0
    %344 = vmatpush1.msra.mxu0 0.0
    %345 = vmatprep.subr.mxu0 0.0
    %346 = vmatpush1.msra.mxu0 0.0
    %347 = vmatprep.subr.mxu0 0.0
    %348 = vmatpush1.msra.mxu0 0.0
    %349 = vmatprep.subr.mxu0 0.0
    %350 = vmatpush1.msra.mxu0 0.0
    %351 = vmatprep.subr.mxu0 0.0
    %352 = vmatpush1.msra.mxu0 0.0
    %353 = vmatprep.mubr.f32.mxu0 0.0
    %354 = vmatmul.mubr.f32.gmra.mrb[0].mxu0 %v284
    %v355 = vpop.f32.mrb[0].mxu0
    %v356 = vadd.f32 0.0, %v355
    %v357 = vpop.f32.mrb[0].mxu0
    %358 = vdwg.mxu0
    %360 = vset.pattern.permute.xlu0 0
    %361 = vperm.xlu0 %360, %v281
    %v362 = vpop.permute.xlu0 %361
    %v364 = vadd.f32 %v362, %v356
    %v365 = vld [vmem:[%s116] sm:$0xf]
    %366 = vrot.lane.b32.xlu0 %v279, 127
    %v367 = vpop.permute.xlu0 %366
    %v369 = vsel %vm32, %v365, 0
    %v371 = vsel %vm36, %v367, 0
    %373 = vmatprep.subr.mxu0 0.0
    %374 = vmatpush1.msra.mxu0 %v371
    %375 = vmatprep.subr.mxu0 0.0
    %376 = vmatpush1.msra.mxu0 0.0
    %377 = vmatprep.subr.mxu0 0.0
    %378 = vmatpush1.msra.mxu0 0.0
    %379 = vmatprep.subr.mxu0 0.0
    %380 = vmatpush1.msra.mxu0 0.0
    %381 = vmatprep.subr.mxu0 0.0
    %382 = vmatpush1.msra.mxu0 0.0
    %383 = vmatprep.subr.mxu0 0.0
    %384 = vmatpush1.msra.mxu0 0.0
    %385 = vmatprep.subr.mxu0 0.0
    %386 = vmatpush1.msra.mxu0 0.0
    %387 = vmatprep.subr.mxu0 0.0
    %388 = vmatpush1.msra.mxu0 0.0
    %389 = vmatprep.subr.mxu0 0.0
    %390 = vmatpush1.msra.mxu0 0.0
    %391 = vmatprep.subr.mxu0 0.0
    %392 = vmatpush1.msra.mxu0 0.0
    %393 = vmatprep.subr.mxu0 0.0
    %394 = vmatpush1.msra.mxu0 0.0
    %395 = vmatprep.subr.mxu0 0.0
    %396 = vmatpush1.msra.mxu0 0.0
    %397 = vmatprep.subr.mxu0 0.0
    %398 = vmatpush1.msra.mxu0 0.0
    %399 = vmatprep.subr.mxu0 0.0
    %400 = vmatpush1.msra.mxu0 0.0
    %401 = vmatprep.subr.mxu0 0.0
    %402 = vmatpush1.msra.mxu0 0.0
    %403 = vmatprep.subr.mxu0 0.0
    %404 = vmatpush1.msra.mxu0 0.0
    %405 = vmatprep.subr.mxu0 0.0
    %406 = vmatpush1.msra.mxu0 0.0
    %407 = vmatprep.subr.mxu0 0.0
    %408 = vmatpush1.msra.mxu0 0.0
    %409 = vmatprep.subr.mxu0 0.0
    %410 = vmatpush1.msra.mxu0 0.0
    %411 = vmatprep.subr.mxu0 0.0
    %412 = vmatpush1.msra.mxu0 0.0
    %413 = vmatprep.subr.mxu0 0.0
    %414 = vmatpush1.msra.mxu0 0.0
    %415 = vmatprep.subr.mxu0 0.0
    %416 = vmatpush1.msra.mxu0 0.0
    %417 = vmatprep.subr.mxu0 0.0
    %418 = vmatpush1.msra.mxu0 0.0
    %419 = vmatprep.subr.mxu0 0.0
    %420 = vmatpush1.msra.mxu0 0.0
    %421 = vmatprep.subr.mxu0 0.0
    %422 = vmatpush1.msra.mxu0 0.0
    %423 = vmatprep.subr.mxu0 0.0
    %424 = vmatpush1.msra.mxu0 0.0
    %425 = vmatprep.subr.mxu0 0.0
    %426 = vmatpush1.msra.mxu0 0.0
    %427 = vmatprep.subr.mxu0 0.0
    %428 = vmatpush1.msra.mxu0 0.0
    %429 = vmatprep.subr.mxu0 0.0
    %430 = vmatpush1.msra.mxu0 0.0
    %431 = vmatprep.subr.mxu0 0.0
    %432 = vmatpush1.msra.mxu0 0.0
    %433 = vmatprep.subr.mxu0 0.0
    %434 = vmatpush1.msra.mxu0 0.0
    %435 = vmatprep.subr.mxu0 0.0
    %436 = vmatpush1.msra.mxu0 0.0
    %437 = vmatprep.mubr.f32.mxu0 0.0
    %438 = vmatmul.mubr.f32.gmra.mrb[0].mxu0 %v369
    %v439 = vpop.f32.mrb[0].mxu0
    %v440 = vadd.f32 0.0, %v439
    %v441 = vpop.f32.mrb[0].mxu0
    %442 = vdwg.mxu0
    %v443 = vadd.f32 %v364, %v440
    %v444 = vld [vmem:[%s196] sm:$0xf]
    %445 = vrot.lane.b32.xlu0 %v279, 126
    %v446 = vpop.permute.xlu0 %445
    %v448 = vsel %vm32, %v444, 0
    %v450 = vsel %vm36, %v446, 0
    %452 = vmatprep.subr.mxu0 0.0
    %453 = vmatpush1.msra.mxu0 %v450
    %454 = vmatprep.subr.mxu0 0.0
    %455 = vmatpush1.msra.mxu0 0.0
    %456 = vmatprep.subr.mxu0 0.0
    %457 = vmatpush1.msra.mxu0 0.0
    %458 = vmatprep.subr.mxu0 0.0
    %459 = vmatpush1.msra.mxu0 0.0
    %460 = vmatprep.subr.mxu0 0.0
    %461 = vmatpush1.msra.mxu0 0.0
    %462 = vmatprep.subr.mxu0 0.0
    %463 = vmatpush1.msra.mxu0 0.0
    %464 = vmatprep.subr.mxu0 0.0
    %465 = vmatpush1.msra.mxu0 0.0
    %466 = vmatprep.subr.mxu0 0.0
    %467 = vmatpush1.msra.mxu0 0.0
    %468 = vmatprep.subr.mxu0 0.0
    %469 = vmatpush1.msra.mxu0 0.0
    %470 = vmatprep.subr.mxu0 0.0
    %471 = vmatpush1.msra.mxu0 0.0
    %472 = vmatprep.subr.mxu0 0.0
    %473 = vmatpush1.msra.mxu0 0.0
    %474 = vmatprep.subr.mxu0 0.0
    %475 = vmatpush1.msra.mxu0 0.0
    %476 = vmatprep.subr.mxu0 0.0
    %477 = vmatpush1.msra.mxu0 0.0
    %478 = vmatprep.subr.mxu0 0.0
    %479 = vmatpush1.msra.mxu0 0.0
    %480 = vmatprep.subr.mxu0 0.0
    %481 = vmatpush1.msra.mxu0 0.0
    %482 = vmatprep.subr.mxu0 0.0
    %483 = vmatpush1.msra.mxu0 0.0
    %484 = vmatprep.subr.mxu0 0.0
    %485 = vmatpush1.msra.mxu0 0.0
    %486 = vmatprep.subr.mxu0 0.0
    %487 = vmatpush1.msra.mxu0 0.0
    %488 = vmatprep.subr.mxu0 0.0
    %489 = vmatpush1.msra.mxu0 0.0
    %490 = vmatprep.subr.mxu0 0.0
    %491 = vmatpush1.msra.mxu0 0.0
    %492 = vmatprep.subr.mxu0 0.0
    %493 = vmatpush1.msra.mxu0 0.0
    %494 = vmatprep.subr.mxu0 0.0
    %495 = vmatpush1.msra.mxu0 0.0
    %496 = vmatprep.subr.mxu0 0.0
    %497 = vmatpush1.msra.mxu0 0.0
    %498 = vmatprep.subr.mxu0 0.0
    %499 = vmatpush1.msra.mxu0 0.0
    %500 = vmatprep.subr.mxu0 0.0
    %501 = vmatpush1.msra.mxu0 0.0
    %502 = vmatprep.subr.mxu0 0.0
    %503 = vmatpush1.msra.mxu0 0.0
    %504 = vmatprep.subr.mxu0 0.0
    %505 = vmatpush1.msra.mxu0 0.0
    %506 = vmatprep.subr.mxu0 0.0
    %507 = vmatpush1.msra.mxu0 0.0
    %508 = vmatprep.subr.mxu0 0.0
    %509 = vmatpush1.msra.mxu0 0.0
    %510 = vmatprep.subr.mxu0 0.0
    %511 = vmatpush1.msra.mxu0 0.0
    %512 = vmatprep.subr.mxu0 0.0
    %513 = vmatpush1.msra.mxu0 0.0
    %514 = vmatprep.subr.mxu0 0.0
    %515 = vmatpush1.msra.mxu0 0.0
    %516 = vmatprep.mubr.f32.mxu0 0.0
    %517 = vmatmul.mubr.f32.gmra.mrb[0].mxu0 %v448
    %v518 = vpop.f32.mrb[0].mxu0
    %v519 = vadd.f32 0.0, %v518
    %v520 = vpop.f32.mrb[0].mxu0
    %521 = vdwg.mxu0
    %v522 = vadd.f32 %v443, %v519
    %s523 = scalar_lea.vmem [#allocation5], 4
    %524 = vst.msk [vmem:[%s523] sm:$0xf] %vm276, %v522
    // Predicated region
    $region18: #{tpu_custom_call.1} parent=1 // pred_check
      _
    $region19: #{tpu_custom_call.1} parent=1 // pred_check_branch
      %526 = sbr.rel (0) target = $region21
    $region20: #{tpu_custom_call.1} parent=1 // pred_region
      %s528 = ssub.s32 128, 128
      %529 = vsyncadd [#allocation4], %s528
      %s530 = sshll.u32 [#allocation5], 4
      %s531 = int_to_ptr.vmem [resolvable:$true] %s530
      %536 = dma.vmem_to_hbm [thread:$0]  %s531, 128, %s3, [#allocation4], 64, 64, 4
    $region21: #{tpu_custom_call.1} parent=1 // pred_fallthru
      _
    // Predicated region
    $region22: #{tpu_custom_call.1} parent=1 // pred_check
      _
    $region23: #{tpu_custom_call.1} parent=1 // pred_check_branch
      %538 = sbr.rel (0) target = $region25
    $region24: #{tpu_custom_call.1} parent=1 // pred_region
      %539 = dma.done [#allocation4], 128
    $region25: #{tpu_custom_call.1} parent=1 // pred_fallthru
      _
    %540 = vsyncpa [#allocation3], 1
    %541 = vsyncpa [#allocation4], 1

</llo_original>
